<compile_context>
chip_gen: v5e
topology: v5e:2x2
jax: 0.10.0
libtpu: 0.0.40
codegen_flags: <defaults>
</compile_context>

<pallas_src>
import functools

import jax
import jax.numpy as jnp
from jax.experimental import pallas as pl


def mlp_kernel(x_ref, w1_ref, b1_ref, w2_ref, b2_ref, out_ref):
    # fc1: (B, D) @ (D, H) + (1, H) -> ReLU, accumulated in f32 on the MXU/VPU.
    h = jnp.dot(x_ref[...], w1_ref[...], preferred_element_type=jnp.float32)
    h = h + b1_ref[...]                      # broadcast (1, H) over rows
    h = jnp.maximum(h, 0.0)                  # ReLU on the VPU (f32)
    # fc2: (B, H) @ (H, Cp) + (1, Cp) -> full 128-lane output tile (lane-dense store).
    y = jnp.dot(h, w2_ref[...], preferred_element_type=jnp.float32)
    out_ref[...] = (y + b2_ref[...]).astype(out_ref.dtype)


def prepare_params(w1, b1, w2, b2, *, lane_pad=128):
    """One-time parameter prep (do this at init, NOT per forward call).

    w1: (D, H); b1: (H,); w2: (H, C); b2: (C,)  ->  kernel-ready tuple:
      (w1 (D, H), b1 (1, H), w2_padded (H, 128), b2_padded (1, 128))
    Padded columns are zero, so slicing the kernel output [:, :C] is exact.
    """
    H, C = w2.shape
    c_pad = max(lane_pad, C)
    w2_p = jnp.zeros((H, c_pad), dtype=w2.dtype).at[:, :C].set(w2)
    b2_p = jnp.zeros((1, c_pad), dtype=b2.dtype).at[0, :C].set(b2)
    b1_2d = b1.reshape(1, -1)
    return (w1, b1_2d, w2_p, b2_p)


@functools.partial(jax.jit, static_argnames=("num_classes",))
def neural_net_forward(x, params, *, num_classes):
    """x: (B, D) f32; params from prepare_params().  Returns (B, num_classes) f32."""
    w1, b1_2d, w2_p, b2_2d = params
    B, D = x.shape
    H = w1.shape[1]
    C_pad = w2_p.shape[1]

    # Advisory cost hint for XLA's scheduler around the custom call.
    flops = 2 * B * D * H + 2 * B * H * C_pad + B * (2 * H + C_pad)
    bytes_accessed = 4 * (B * D + D * H + H + H * C_pad + C_pad + B * C_pad)
    cost = pl.CostEstimate(
        flops=int(flops), transcendentals=0, bytes_accessed=int(bytes_accessed)
    )

    # No grid: whole problem fits comfortably in VMEM; a grid would only add
    # sequential-loop overhead at this size (see TODO(synk) above for the
    # large-B tiling plan).
    out_padded = pl.pallas_call(
        mlp_kernel,
        out_shape=jax.ShapeDtypeStruct((B, C_pad), jnp.float32),
        in_specs=[
            pl.BlockSpec((B, D), lambda: (0, 0)),
            pl.BlockSpec((D, H), lambda: (0, 0)),
            pl.BlockSpec((1, H), lambda: (0, 0)),
            pl.BlockSpec((H, C_pad), lambda: (0, 0)),
            pl.BlockSpec((1, C_pad), lambda: (0, 0)),
        ],
        out_specs=pl.BlockSpec((B, C_pad), lambda: (0, 0)),
        cost_estimate=cost,
    )(x, w1, b1_2d, w2_p, b2_2d)

    return out_padded[:, :num_classes]


def reference_forward(x, w1, b1, w2, b2):
    h = jnp.maximum(x @ w1 + b1, 0.0)
    return h @ w2 + b2


if __name__ == "__main__":
    # Small shapes consistent with the module: batch=8, input_dim=32,
    # hidden=128 (fixed by fc1), num_classes=10.
    B, D, H, C = 8, 32, 128, 10

    key = jax.random.PRNGKey(0)
    k_x, k_w1, k_b1, k_w2, k_b2 = jax.random.split(key, 5)

    x = jax.random.normal(k_x, (B, D), dtype=jnp.float32)
    # Deterministic "Kaiming-ish" init; PyTorch layout is (out, in) — we keep
    # (in, out) since the kernel computes x @ W + b.
    w1 = jax.random.normal(k_w1, (D, H), dtype=jnp.float32) * (1.0 / D) ** 0.5
    b1 = jax.random.normal(k_b1, (H,), dtype=jnp.float32) * 0.01
    w2 = jax.random.normal(k_w2, (H, C), dtype=jnp.float32) * (1.0 / H) ** 0.5
    b2 = jax.random.normal(k_b2, (C,), dtype=jnp.float32) * 0.01

    # One-time parameter prep (padding/reshapes hoisted out of the forward path).
    params = jax.block_until_ready(prepare_params(w1, b1, w2, b2))

    out = neural_net_forward(x, params, num_classes=C)
    out = jax.block_until_ready(out)

    ref = reference_forward(x, w1, b1, w2, b2)
    assert out.shape == (B, C)
    assert jnp.allclose(out, ref, atol=1e-4, rtol=1e-4)

    print("KERNEL_OK")
</pallas_src>

<mosaic_0001>
module attributes {stable_mosaic.version = 11 : i64} {
  func.func @mlp_kernel(%arg0: memref<8x32xf32, #tpu.memory_space<vmem>>, %arg1: memref<32x128xf32, #tpu.memory_space<vmem>>, %arg2: memref<1x128xf32, #tpu.memory_space<vmem>>, %arg3: memref<128x128xf32, #tpu.memory_space<vmem>>, %arg4: memref<1x128xf32, #tpu.memory_space<vmem>>, %arg5: memref<8x128xf32, #tpu.memory_space<vmem>>) attributes {dimension_semantics = [], scalar_prefetch = 0 : i64, scratch_operands = 0 : i64, tpu.core_type = #tpu.core_type<tc>} {
    %c0 = arith.constant 0 : index
    %c0_0 = arith.constant 0 : index
    %0 = vector.load %arg0[%c0, %c0_0] : memref<8x32xf32, #tpu.memory_space<vmem>>, vector<8x32xf32>
    %c0_1 = arith.constant 0 : index
    %c0_2 = arith.constant 0 : index
    %1 = vector.load %arg1[%c0_1, %c0_2] : memref<32x128xf32, #tpu.memory_space<vmem>>, vector<32x128xf32>
    %cst = arith.constant dense<0.000000e+00> : vector<8x128xf32>
    %2 = tpu.matmul %0, %1, %cst {dimension_numbers = #tpu.dot_dimension_numbers<[1], [0], [0], [1], [0, 0, 1, 1], [], []>} : vector<8x32xf32>, vector<32x128xf32>, vector<8x128xf32> -> vector<8x128xf32>
    %c0_3 = arith.constant 0 : index
    %c0_4 = arith.constant 0 : index
    %3 = vector.load %arg2[%c0_3, %c0_4] : memref<1x128xf32, #tpu.memory_space<vmem>>, vector<1x128xf32>
    %4 = vector.broadcast %3 : vector<1x128xf32> to vector<8x128xf32>
    %5 = arith.addf %2, %4 : vector<8x128xf32>
    %cst_5 = arith.constant 0.000000e+00 : f32
    %6 = vector.broadcast %cst_5 : f32 to vector<8x128xf32>
    %7 = arith.maximumf %5, %6 : vector<8x128xf32>
    %c0_6 = arith.constant 0 : index
    %c0_7 = arith.constant 0 : index
    %8 = vector.load %arg3[%c0_6, %c0_7] : memref<128x128xf32, #tpu.memory_space<vmem>>, vector<128x128xf32>
    %cst_8 = arith.constant dense<0.000000e+00> : vector<8x128xf32>
    %9 = tpu.matmul %7, %8, %cst_8 {dimension_numbers = #tpu.dot_dimension_numbers<[1], [0], [0], [1], [0, 0, 1, 1], [], []>} : vector<8x128xf32>, vector<128x128xf32>, vector<8x128xf32> -> vector<8x128xf32>
    %c0_9 = arith.constant 0 : index
    %c0_10 = arith.constant 0 : index
    %10 = vector.load %arg4[%c0_9, %c0_10] : memref<1x128xf32, #tpu.memory_space<vmem>>, vector<1x128xf32>
    %11 = vector.broadcast %10 : vector<1x128xf32> to vector<8x128xf32>
    %12 = arith.addf %9, %11 : vector<8x128xf32>
    %c0_11 = arith.constant 0 : index
    %c0_12 = arith.constant 0 : index
    %13 = vector.load %arg5[%c0_11, %c0_12] : memref<8x128xf32, #tpu.memory_space<vmem>>, vector<8x128xf32>
    tpu.vector_store %arg5[%c0_11, %c0_12], %12 {strides = array<i32>} : memref<8x128xf32, #tpu.memory_space<vmem>>, vector<8x128xf32>,
    return
  }
}

</mosaic_0001>

<llo_original>
// kernel: neural_net_forward.1
$region0: #{neural_net_forward.1}
  #allocation0 [shape = 'u32[]', space=smem, size = 0x4, offset = 0x4, fixed_abs, tag = 'smem constant byte address 0x4 - core index']
  #allocation1 [shape = 'u32[72,128]{1,0:T(1,128)}', space=vmem, size = 0x9000, scoped, tag = 'internal scratch']
  %s0 = inlined_call_operand.hbm [shape: f32[8,32], index: 0, kind: input, shape index: {}]
  %s1 = inlined_call_operand.hbm [shape: f32[32,128], index: 1, kind: input, shape index: {}]
  %s2 = inlined_call_operand.vmem [shape: f32[1,128], index: 2, kind: input, shape index: {}]
  %s3 = inlined_call_operand.hbm [shape: f32[128,128], index: 3, kind: input, shape index: {}]
  %s4 = inlined_call_operand.vmem [shape: f32[1,128], index: 4, kind: input, shape index: {}]
  %s5 = inlined_call_operand.hbm [shape: f32[8,128], index: 5, kind: output, shape index: {}]
  %s6 = sld [smem:[#allocation0]]
  $region42: #{neural_net_forward.1} parent=0
    _
  %s8 = ssub.s32 1, %s6
  %s9 = scalar_select 0, %s8, %s6
  $region1: #{neural_net_forward.1} parent=0
    #allocation2 [shape = 'u8[4096]{0}', space=vmem, size = 0x1000, scoped, tag = 'input window, operand 0, single buffered']
    #allocation3 [shape = 's32[1]{0}', space=sflag, size = 0x4, scoped, tag = 'scoped memory for neural_net_forward.1']
    #allocation4 [shape = 's32[1]{0}', space=sflag, size = 0x4, scoped, tag = 'scoped memory for neural_net_forward.1']
    #allocation5 [shape = 'u8[16384]{0}', space=vmem, size = 0x4000, scoped, tag = 'input window, operand 1, single buffered']
    #allocation6 [shape = 's32[1]{0}', space=sflag, size = 0x4, scoped, tag = 'scoped memory for neural_net_forward.1']
    #allocation7 [shape = 'u8[65536]{0}', space=vmem, size = 0x10000, scoped, tag = 'input window, operand 3, single buffered']
    #allocation8 [shape = 'u8[4096]{0}', space=vmem, size = 0x1000, scoped, tag = 'output window, operand 0, single buffered']
    %10 = vsyncpa [#allocation3], 0
    %11 = vsyncpa [#allocation6], 0
    %12 = vsyncpa [#allocation4], 0
    // Predicated region
    $region2: #{neural_net_forward.1} parent=1 // pred_check
      _
    $region3: #{neural_net_forward.1} parent=1 // pred_check_branch
      %14 = sbr.rel (0) target = $region5
    $region4: #{neural_net_forward.1} parent=1 // pred_region
      %16 = vsyncadd [#allocation3], 0
      %s18 = sshll.u32 %s0, 4
      %s19 = int_to_ptr.hbm [resolvable:$true] %s18
      %s20 = sshll.u32 [#allocation2], 4
      %s21 = int_to_ptr.vmem [resolvable:$true] %s20
      %23 = dma.hbm_to_vmem [thread:$0]  %s19, 128, %s21, [#allocation3]
    $region5: #{neural_net_forward.1} parent=1 // pred_fallthru
      _
    // Predicated region
    $region6: #{neural_net_forward.1} parent=1 // pred_check
      _
    $region7: #{neural_net_forward.1} parent=1 // pred_check_branch
      %25 = sbr.rel (0) target = $region9
    $region8: #{neural_net_forward.1} parent=1 // pred_region
      %27 = vsyncadd [#allocation6], 0
      %s28 = sshll.u32 %s1, 4
      %s29 = int_to_ptr.hbm [resolvable:$true] %s28
      %s30 = sshll.u32 [#allocation5], 4
      %s31 = int_to_ptr.vmem [resolvable:$true] %s30
      %36 = dma.hbm_to_vmem [thread:$0]  %s29, 512, %s31, [#allocation6], 128, 128, 8
    $region9: #{neural_net_forward.1} parent=1 // pred_fallthru
      _
    // Predicated region
    $region10: #{neural_net_forward.1} parent=1 // pred_check
      _
    $region11: #{neural_net_forward.1} parent=1 // pred_check_branch
      %38 = sbr.rel (0) target = $region13
    $region12: #{neural_net_forward.1} parent=1 // pred_region
      _
    $region13: #{neural_net_forward.1} parent=1 // pred_fallthru
      _
    // Predicated region
    $region14: #{neural_net_forward.1} parent=1 // pred_check
      _
    $region15: #{neural_net_forward.1} parent=1 // pred_check_branch
      %40 = sbr.rel (0) target = $region17
    $region16: #{neural_net_forward.1} parent=1 // pred_region
      %42 = vsyncadd [#allocation6], 0
      %s43 = sshll.u32 %s3, 4
      %s44 = int_to_ptr.hbm [resolvable:$true] %s43
      %s45 = sshll.u32 [#allocation7], 4
      %s46 = int_to_ptr.vmem [resolvable:$true] %s45
      %51 = dma.hbm_to_vmem [thread:$0]  %s44, 2048, %s46, [#allocation6], 128, 128, 8
    $region17: #{neural_net_forward.1} parent=1 // pred_fallthru
      _
    // Predicated region
    $region18: #{neural_net_forward.1} parent=1 // pred_check
      _
    $region19: #{neural_net_forward.1} parent=1 // pred_check_branch
      %53 = sbr.rel (0) target = $region21
    $region20: #{neural_net_forward.1} parent=1 // pred_region
      _
    $region21: #{neural_net_forward.1} parent=1 // pred_fallthru
      _
    // Predicated region
    $region22: #{neural_net_forward.1} parent=1 // pred_check
      _
    $region23: #{neural_net_forward.1} parent=1 // pred_check_branch
      %55 = sbr.rel (0) target = $region25
    $region24: #{neural_net_forward.1} parent=1 // pred_region
      %57 = dma.done [#allocation3], 128
    $region25: #{neural_net_forward.1} parent=1 // pred_fallthru
      _
    // Predicated region
    $region26: #{neural_net_forward.1} parent=1 // pred_check
      _
    $region27: #{neural_net_forward.1} parent=1 // pred_check_branch
      %59 = sbr.rel (0) target = $region29
    $region28: #{neural_net_forward.1} parent=1 // pred_region
      %61 = dma.done [#allocation6], 512
    $region29: #{neural_net_forward.1} parent=1 // pred_fallthru
      _
    // Predicated region
    $region30: #{neural_net_forward.1} parent=1 // pred_check
      _
    $region31: #{neural_net_forward.1} parent=1 // pred_check_branch
      %63 = sbr.rel (0) target = $region33
    $region32: #{neural_net_forward.1} parent=1 // pred_region
      %65 = dma.done [#allocation6], 2048
    $region33: #{neural_net_forward.1} parent=1 // pred_fallthru
      _
    %v66 = vld [vmem:[#allocation2] sm:$0xff]
    %v67 = vld [vmem:[#allocation5] sm:$0xff]
    %v68 = vld [vmem:[#allocation5 + $0x8] sm:$0xff]
    %v69 = vld [vmem:[#allocation5 + $0x10] sm:$0xff]
    %v70 = vld [vmem:[#allocation5 + $0x18] sm:$0xff]
    %v71 = vld [vmem:[%s2] sm:$0x1]
    %v73 = vperm.slane %v71, 0
    %vm75 = vcmask 261120
    %v77 = vsel %vm75, %v66, 0
    %79 = vmatpush.msra.mxu0 0.0
    %80 = vmatpush.msra.mxu0 0.0
    %81 = vmatpush.msra.mxu0 0.0
    %82 = vmatpush.msra.mxu0 0.0
    %83 = vmatpush.msra.mxu0 0.0
    %84 = vmatpush.msra.mxu0 0.0
    %85 = vmatpush.msra.mxu0 0.0
    %86 = vmatpush.msra.mxu0 0.0
    %87 = vmatpush.msra.mxu0 0.0
    %88 = vmatpush.msra.mxu0 0.0
    %89 = vmatpush.msra.mxu0 0.0
    %90 = vmatpush.msra.mxu0 0.0
    %91 = vmatpush.msra.mxu0 %v70
    %92 = vmatpush.msra.mxu0 %v69
    %93 = vmatpush.msra.mxu0 %v68
    %94 = vmatpush.msra.mxu0 %v67
    %95 = vmatmul.f32.gmra.mxu0 %v77
    %v96 = vpop.f32.mrf.mxu0
    %v97 = vadd.f32 %v73, %v96
    %98 = vdwg.mxu0
    %v99 = vmax.f32 %v97, 0.0
    %v100 = vld [vmem:[#allocation7] sm:$0xff]
    %v101 = vld [vmem:[#allocation7 + $0x8] sm:$0xff]
    %v102 = vld [vmem:[#allocation7 + $0x10] sm:$0xff]
    %v103 = vld [vmem:[#allocation7 + $0x18] sm:$0xff]
    %v104 = vld [vmem:[#allocation7 + $0x20] sm:$0xff]
    %v105 = vld [vmem:[#allocation7 + $0x28] sm:$0xff]
    %v106 = vld [vmem:[#allocation7 + $0x30] sm:$0xff]
    %v107 = vld [vmem:[#allocation7 + $0x38] sm:$0xff]
    %v108 = vld [vmem:[#allocation7 + $0x40] sm:$0xff]
    %v109 = vld [vmem:[#allocation7 + $0x48] sm:$0xff]
    %v110 = vld [vmem:[#allocation7 + $0x50] sm:$0xff]
    %v111 = vld [vmem:[#allocation7 + $0x58] sm:$0xff]
    %v112 = vld [vmem:[#allocation7 + $0x60] sm:$0xff]
    %v113 = vld [vmem:[#allocation7 + $0x68] sm:$0xff]
    %v114 = vld [vmem:[#allocation7 + $0x70] sm:$0xff]
    %v115 = vld [vmem:[#allocation7 + $0x78] sm:$0xff]
    %v116 = vld [vmem:[%s4] sm:$0x1]
    %v118 = vperm.slane %v116, 0
    %120 = vmatpush.msra.mxu0 %v115
    %121 = vmatpush.msra.mxu0 %v114
    %122 = vmatpush.msra.mxu0 %v113
    %123 = vmatpush.msra.mxu0 %v112
    %124 = vmatpush.msra.mxu0 %v111
    %125 = vmatpush.msra.mxu0 %v110
    %126 = vmatpush.msra.mxu0 %v109
    %127 = vmatpush.msra.mxu0 %v108
    %128 = vmatpush.msra.mxu0 %v107
    %129 = vmatpush.msra.mxu0 %v106
    %130 = vmatpush.msra.mxu0 %v105
    %131 = vmatpush.msra.mxu0 %v104
    %132 = vmatpush.msra.mxu0 %v103
    %133 = vmatpush.msra.mxu0 %v102
    %134 = vmatpush.msra.mxu0 %v101
    %135 = vmatpush.msra.mxu0 %v100
    %136 = vmatmul.f32.gmra.mxu0 %v99
    %v137 = vpop.f32.mrf.mxu0
    %v138 = vadd.f32 %v118, %v137
    %139 = vdwg.mxu0
    %140 = vst [vmem:[#allocation8] sm:$0xff] %v138
    // Predicated region
    $region34: #{neural_net_forward.1} parent=1 // pred_check
      _
    $region35: #{neural_net_forward.1} parent=1 // pred_check_branch
      %142 = sbr.rel (0) target = $region37
    $region36: #{neural_net_forward.1} parent=1 // pred_region
      %144 = vsyncadd [#allocation4], 0
      %s146 = sshll.u32 [#allocation8], 4
      %s147 = int_to_ptr.vmem [resolvable:$true] %s146
      %s148 = sshll.u32 %s5, 4
      %s149 = int_to_ptr.hbm [resolvable:$true] %s148
      %151 = dma.vmem_to_hbm [thread:$0]  %s147, 128, %s149, [#allocation4]
    $region37: #{neural_net_forward.1} parent=1 // pred_fallthru
      _
    // Predicated region
    $region38: #{neural_net_forward.1} parent=1 // pred_check
      _
    $region39: #{neural_net_forward.1} parent=1 // pred_check_branch
      %153 = sbr.rel (0) target = $region41
    $region40: #{neural_net_forward.1} parent=1 // pred_region
      %155 = dma.done [#allocation4], 128
    $region41: #{neural_net_forward.1} parent=1 // pred_fallthru
      _
    %156 = vsyncpa [#allocation3], 1
    %157 = vsyncpa [#allocation6], 1
    %158 = vsyncpa [#allocation4], 1

</llo_original>
